<compile_context>
chip_gen: v5e
topology: v5e:2x2
jax: 0.10.0
libtpu: 0.0.40
codegen_flags: <defaults>
</compile_context>

<pallas_src>
import jax
import jax.numpy as jnp
from jax.experimental import pallas as pl
from jax.experimental.pallas import tpu as pltpu


# --------------------------------------------------------------------------- #
# Kernel
# --------------------------------------------------------------------------- #
def _spike_add_kernel(w0_ref, w1_ref, bias_ref, vthr_ref,
                      a_ref, b_ref, out_ref, mem_ref):
    t = pl.program_id(2)

    # New (batch-tile, lane-tile): reset the membrane potential. The time axis
    # is the innermost ("arbitrary") grid axis, so the VMEM scratch carries the
    # membrane across the timesteps of the same tile.
    @pl.when(t == 0)
    def _():
        mem_ref[...] = jnp.zeros_like(mem_ref)

    vthr = vthr_ref[0]                                    # scalar (SMEM)
    # (Bt, Lt) block; params are (1, Lt) rows -> stride-0 sublane broadcast.
    # Pure VPU / memory-bound, no MXU.
    drive = (a_ref[0] * w0_ref[...]
             + b_ref[0] * w1_ref[...]
             + bias_ref[...])
    mem = mem_ref[...] + drive
    ge = mem >= vthr                                      # bool predicate
    out_ref[0] = ge.astype(out_ref.dtype)                 # spikes are exactly 0/1
    mem_ref[...] = jnp.where(ge, mem - vthr, mem)         # subtraction reset


# --------------------------------------------------------------------------- #
# Tiling / chip heuristics
# --------------------------------------------------------------------------- #
def _divisors(n):
    divs = set()
    i = 1
    while i * i <= n:
        if n % i == 0:
            divs.add(i)
            divs.add(n // i)
        i += 1
    return sorted(divs)


def _chip_info():
    """Return (usable VMEM bytes, multi-TensorCore?) for the current backend."""
    vmem_cap = 64 << 20                       # conservative fallback (v7x per-TC)
    try:
        vmem_cap = int(pltpu.get_tpu_info().vmem_capacity_bytes)
    except Exception:
        pass
    kind = ""
    try:
        kind = jax.devices()[0].device_kind.lower()
    except Exception:
        pass
    multi_core = "v7" in kind                 # v7x: 2 TensorCores share the grid
    usable = (vmem_cap * 3) // 4              # leave compiler scratch headroom
    if multi_core:
        usable = min(usable, 48 << 20)        # never request v7x's full 64 MiB
    return usable, multi_core


def _pick_tiles(B, L, vmem_usable, multi_core, target_bytes=4 << 20):
    """Pick (Bt, Lt) for (B, L=C*H*W) blocks.

    Last-two block dims must be multiples of (8, 128) or equal the full dims.
    The live working set is ~7 f32 blocks (a, b double-buffered, out
    double-buffered, membrane scratch), so each block is capped at ~usable/8.
    """
    lane_divs = [d for d in _divisors(L) if d == L or d % 128 == 0]
    batch_divs = [d for d in _divisors(B) if d == B or d % 8 == 0]

    cap = max(512, min(target_bytes, vmem_usable // 8))   # bytes per f32 block

    cands = [(bt, lt) for bt in batch_divs for lt in lane_divs
             if bt * lt * 4 <= cap]
    if not cands:
        # Even the smallest legal block exceeds the cap: take the smallest one
        # (correctness over peak perf).
        cands = [(min(batch_divs), min(lane_divs))]

    if multi_core:
        # Only on multi-TensorCore chips: require >=2 parallel tiles if possible
        # (on single-TC chips this would just halve the block for nothing).
        par = [(bt, lt) for (bt, lt) in cands if (B // bt) * (L // lt) >= 2]
        if par:
            cands = par

    # Largest block wins; tie-break to the widest lane tile (densest stores).
    bt, lt = max(cands, key=lambda c: (c[0] * c[1], c[1]))
    return bt, lt


# --------------------------------------------------------------------------- #
# Wrapper
# --------------------------------------------------------------------------- #
def spike_add_forward(a, b, weight, bias, vthr, timesteps,
                      out_dtype=jnp.bfloat16):
    """SpikeAdd.forward for the SpikeTensor branch.

    a, b   : (T*B, C, H, W) float32 (PyTorch NCHW layout, timesteps folded
             into the leading batch dim exactly like the reference).
    weight : (C, 2); bias : (C,); vthr : scalar; timesteps : T.
    Returns (T*B, C, H, W) spikes (the SpikeTensor .data). Spikes are exactly
    0/1, so the bfloat16 default is exact and halves output HBM traffic; pass
    out_dtype=jnp.float32 to match the PyTorch dtype bit-for-bit.
    """
    TB, C, H, W = a.shape
    assert TB % timesteps == 0
    B = TB // timesteps
    L = C * H * W

    # Pure reshapes from NCHW — no transposes, no extra HBM passes.
    a_k = a.reshape(timesteps, B, L)
    b_k = b.reshape(timesteps, B, L)

    # Per-channel params expanded to lane-dense (1, L) f32 rows (a few KiB) so
    # the in-kernel broadcast is a free stride-0 sublane read.
    w0_row = jnp.repeat(weight[:, 0].astype(jnp.float32), H * W).reshape(1, L)
    w1_row = jnp.repeat(weight[:, 1].astype(jnp.float32), H * W).reshape(1, L)
    bias_row = jnp.repeat(bias.astype(jnp.float32), H * W).reshape(1, L)
    vthr_arr = jnp.asarray(vthr, jnp.float32).reshape(1)

    vmem_usable, multi_core = _chip_info()
    Bt, Lt = _pick_tiles(B, L, vmem_usable, multi_core)
    num_b, num_l = B // Bt, L // Lt

    in_block = Bt * Lt * 4
    out_block = Bt * Lt * jnp.dtype(out_dtype).itemsize
    # a x2 + b x2 + mem (f32) + out x2 + param rows x2 buffers, plus margin.
    live = 5 * in_block + 2 * out_block + 6 * Lt * 4
    vmem_budget = int(max(16 << 20, min(vmem_usable, live + (2 << 20))))

    tile_spec = pl.BlockSpec((1, Bt, Lt), lambda bb, ll, tt: (tt, bb, ll))
    param_spec = pl.BlockSpec((1, Lt), lambda bb, ll, tt: (0, ll))

    out = pl.pallas_call(
        _spike_add_kernel,
        out_shape=jax.ShapeDtypeStruct((timesteps, B, L), out_dtype),
        grid=(num_b, num_l, timesteps),            # time innermost: membrane carry
        in_specs=[
            param_spec,                            # w0   row (1, Lt)
            param_spec,                            # w1   row (1, Lt)
            param_spec,                            # bias row (1, Lt)
            pl.BlockSpec(memory_space=pltpu.MemorySpace.SMEM),  # Vthr scalar
            tile_spec,                             # a
            tile_spec,                             # b
        ],
        out_specs=tile_spec,
        scratch_shapes=[pltpu.VMEM((Bt, Lt), jnp.float32)],      # membrane
        compiler_params=pltpu.CompilerParams(
            dimension_semantics=("parallel", "parallel", "arbitrary"),
            vmem_limit_bytes=vmem_budget),
    )(w0_row, w1_row, bias_row, vthr_arr, a_k, b_k)

    # Pure reshape back to the PyTorch (T*B, C, H, W) layout.
    return out.reshape(timesteps * B, C, H, W)


# --------------------------------------------------------------------------- #
# Pure-JAX reference (mirrors the PyTorch forward, SpikeTensor branch)
# --------------------------------------------------------------------------- #
def spike_add_reference(a, b, weight, bias, vthr, timesteps):
    out = (a * weight[:, 0].reshape(1, -1, 1, 1)
           + b * weight[:, 1].reshape(1, -1, 1, 1)
           + bias.reshape(1, -1, 1, 1))
    TB, C, H, W = out.shape
    B = TB // timesteps
    out_s = out.reshape(timesteps, B, C, H, W)
    mem = jnp.zeros((B, C, H, W), jnp.float32)
    spikes = []
    for t in range(timesteps):
        mem = mem + out_s[t]
        spike = (mem >= vthr).astype(jnp.float32)
        mem = mem - spike * vthr
        spikes.append(spike)
    return jnp.concatenate(spikes, 0)


if __name__ == "__main__":
    T, B, C, H, W = 4, 2, 4, 16, 16

    key = jax.random.PRNGKey(0)
    k_a, k_b, k_w, k_bias = jax.random.split(key, 4)

    # Deterministic synthetic parameters (module registers: weight (C,2),
    # bias (C,), Vthr scalar=1; out_scales / leakage are metadata only).
    weight = 0.5 + 0.1 * jax.random.normal(k_w, (C, 2), jnp.float32)
    bias = 0.05 * jax.random.normal(k_bias, (C,), jnp.float32)
    vthr = jnp.float32(1.0)
    out_scales = jnp.ones((C,), jnp.float32)  # attached to SpikeTensor output; no compute

    # Inputs in PyTorch NCHW layout with timesteps folded into the batch dim.
    a = jax.random.uniform(k_a, (T * B, C, H, W), jnp.float32, 0.0, 1.5)
    b = jax.random.uniform(k_b, (T * B, C, H, W), jnp.float32, 0.0, 1.5)

    out = spike_add_forward(a, b, weight, bias, vthr, T)   # bf16 spikes (exact 0/1)
    out = jax.block_until_ready(out)

    ref = spike_add_reference(a, b, weight, bias, vthr, T)
    assert out.shape == (T * B, C, H, W)
    # Spikes are exactly 0/1 -> exact comparison (a flipped spike is an error of 1.0).
    assert bool(jnp.array_equal(out.astype(jnp.float32), ref)), "mismatch vs reference"

    print("KERNEL_OK")
</pallas_src>

<mosaic_0001>
module attributes {stable_mosaic.version = 11 : i64} {
  func.func @_spike_add_kernel(%arg0: i32, %arg1: i32, %arg2: i32, %arg3: memref<1x1024xf32, #tpu.memory_space<vmem>>, %arg4: memref<1x1024xf32, #tpu.memory_space<vmem>>, %arg5: memref<1x1024xf32, #tpu.memory_space<vmem>>, %arg6: memref<1xf32, #tpu.memory_space<smem>>, %arg7: memref<1x2x1024xf32, #tpu.memory_space<vmem>>, %arg8: memref<1x2x1024xf32, #tpu.memory_space<vmem>>, %arg9: memref<1x2x1024xbf16, #tpu.memory_space<vmem>>, %arg10: memref<2x1024xf32, #tpu.memory_space<vmem>>) attributes {dimension_semantics = [#tpu.dimension_semantics<parallel>, #tpu.dimension_semantics<parallel>, #tpu.dimension_semantics<arbitrary>], iteration_bounds = array<i64: 1, 1, 4>, scalar_prefetch = 0 : i64, scratch_operands = 1 : i64, tpu.core_type = #tpu.core_type<tc>, window_params = [{transform_indices = @transform_0, window_bounds = array<i64: 1, 1024>}, {transform_indices = @transform_1, window_bounds = array<i64: 1, 1024>}, {transform_indices = @transform_2, window_bounds = array<i64: 1, 1024>}, {transform_indices = @transform_3, window_bounds = array<i64: 1>}, {transform_indices = @transform_4, window_bounds = array<i64: 1, 2, 1024>}, {transform_indices = @transform_5, window_bounds = array<i64: 1, 2, 1024>}, {transform_indices = @transform_6, window_bounds = array<i64: 1, 2, 1024>}]} {
    %c0_i32 = arith.constant 0 : i32
    %0 = arith.cmpi eq, %arg2, %c0_i32 : i32
    %1 = arith.extui %0 : i1 to i32
    %c0_i32_0 = arith.constant 0 : i32
    %2 = arith.cmpi ne, %1, %c0_i32_0 : i32
    scf.if %2 {
      %cst = arith.constant 0.000000e+00 : f32
      %32 = vector.broadcast %cst : f32 to vector<2x1024xf32>
      %c0_20 = arith.constant 0 : index
      %c0_21 = arith.constant 0 : index
      %33 = vector.load %arg10[%c0_20, %c0_21] : memref<2x1024xf32, #tpu.memory_space<vmem>>, vector<2x1024xf32>
      tpu.vector_store %arg10[%c0_20, %c0_21], %32 {strides = array<i32>} : memref<2x1024xf32, #tpu.memory_space<vmem>>, vector<2x1024xf32>,
    } else {
    }
    %c0 = arith.constant 0 : index
    %3 = memref.load %arg6[%c0] : memref<1xf32, #tpu.memory_space<smem>>
    %c0_1 = arith.constant 0 : index
    %c0_2 = arith.constant 0 : index
    %c0_3 = arith.constant 0 : index
    %4 = vector.load %arg7[%c0_1, %c0_2, %c0_3] : memref<1x2x1024xf32, #tpu.memory_space<vmem>>, vector<1x2x1024xf32>
    %5 = vector.shape_cast %4 : vector<1x2x1024xf32> to vector<2x1024xf32>
    %c0_4 = arith.constant 0 : index
    %c0_5 = arith.constant 0 : index
    %6 = vector.load %arg3[%c0_4, %c0_5] : memref<1x1024xf32, #tpu.memory_space<vmem>>, vector<1x1024xf32>
    %7 = vector.broadcast %6 : vector<1x1024xf32> to vector<2x1024xf32>
    %8 = arith.mulf %5, %7 : vector<2x1024xf32>
    %c0_6 = arith.constant 0 : index
    %c0_7 = arith.constant 0 : index
    %c0_8 = arith.constant 0 : index
    %9 = vector.load %arg8[%c0_6, %c0_7, %c0_8] : memref<1x2x1024xf32, #tpu.memory_space<vmem>>, vector<1x2x1024xf32>
    %10 = vector.shape_cast %9 : vector<1x2x1024xf32> to vector<2x1024xf32>
    %c0_9 = arith.constant 0 : index
    %c0_10 = arith.constant 0 : index
    %11 = vector.load %arg4[%c0_9, %c0_10] : memref<1x1024xf32, #tpu.memory_space<vmem>>, vector<1x1024xf32>
    %12 = vector.broadcast %11 : vector<1x1024xf32> to vector<2x1024xf32>
    %13 = arith.mulf %10, %12 : vector<2x1024xf32>
    %14 = arith.addf %8, %13 : vector<2x1024xf32>
    %c0_11 = arith.constant 0 : index
    %c0_12 = arith.constant 0 : index
    %15 = vector.load %arg5[%c0_11, %c0_12] : memref<1x1024xf32, #tpu.memory_space<vmem>>, vector<1x1024xf32>
    %16 = vector.broadcast %15 : vector<1x1024xf32> to vector<2x1024xf32>
    %17 = arith.addf %14, %16 : vector<2x1024xf32>
    %c0_13 = arith.constant 0 : index
    %c0_14 = arith.constant 0 : index
    %18 = vector.load %arg10[%c0_13, %c0_14] : memref<2x1024xf32, #tpu.memory_space<vmem>>, vector<2x1024xf32>
    %19 = arith.addf %18, %17 : vector<2x1024xf32>
    %20 = vector.broadcast %3 : f32 to vector<2x1024xf32>
    %21 = arith.cmpf oge, %19, %20 : vector<2x1024xf32>
    %22 = arith.extui %21 : vector<2x1024xi1> to vector<2x1024xi32>
    %23 = arith.sitofp %22 : vector<2x1024xi32> to vector<2x1024xf32>
    %24 = arith.truncf %23 : vector<2x1024xf32> to vector<2x1024xbf16>
    %c0_15 = arith.constant 0 : index
    %c0_16 = arith.constant 0 : index
    %c0_17 = arith.constant 0 : index
    %25 = vector.load %arg9[%c0_15, %c0_16, %c0_17] : memref<1x2x1024xbf16, #tpu.memory_space<vmem>>, vector<1x2x1024xbf16>
    %26 = vector.shape_cast %25 : vector<1x2x1024xbf16> to vector<2x1024xbf16>
    %27 = vector.shape_cast %24 : vector<2x1024xbf16> to vector<1x2x1024xbf16>
    tpu.vector_store %arg9[%c0_15, %c0_16, %c0_17], %27 {strides = array<i32>} : memref<1x2x1024xbf16, #tpu.memory_space<vmem>>, vector<1x2x1024xbf16>,
    %28 = vector.broadcast %3 : f32 to vector<2x1024xf32>
    %29 = arith.subf %19, %28 : vector<2x1024xf32>
    %30 = arith.select %21, %29, %19 : vector<2x1024xi1>, vector<2x1024xf32>
    %c0_18 = arith.constant 0 : index
    %c0_19 = arith.constant 0 : index
    %31 = vector.load %arg10[%c0_18, %c0_19] : memref<2x1024xf32, #tpu.memory_space<vmem>>, vector<2x1024xf32>
    tpu.vector_store %arg10[%c0_18, %c0_19], %30 {strides = array<i32>} : memref<2x1024xf32, #tpu.memory_space<vmem>>, vector<2x1024xf32>,
    return
  }
  func.func @transform_0(%arg0: i32, %arg1: i32, %arg2: i32) -> (i32, i32) {
    %c0_i32 = arith.constant 0 : i32
    %c0_i32_0 = arith.constant 0 : i32
    return %c0_i32, %arg1 : i32, i32
  }
  func.func @transform_1(%arg0: i32, %arg1: i32, %arg2: i32) -> (i32, i32) {
    %c0_i32 = arith.constant 0 : i32
    %c0_i32_0 = arith.constant 0 : i32
    return %c0_i32, %arg1 : i32, i32
  }
  func.func @transform_2(%arg0: i32, %arg1: i32, %arg2: i32) -> (i32, i32) {
    %c0_i32 = arith.constant 0 : i32
    %c0_i32_0 = arith.constant 0 : i32
    return %c0_i32, %arg1 : i32, i32
  }
  func.func @transform_3(%arg0: i32, %arg1: i32, %arg2: i32) -> i32 {
    %c0_i32 = arith.constant 0 : i32
    %c0_i32_0 = arith.constant 0 : i32
    return %c0_i32 : i32
  }
  func.func @transform_4(%arg0: i32, %arg1: i32, %arg2: i32) -> (i32, i32, i32) {
    %c0_i32 = arith.constant 0 : i32
    return %arg2, %arg0, %arg1 : i32, i32, i32
  }
  func.func @transform_5(%arg0: i32, %arg1: i32, %arg2: i32) -> (i32, i32, i32) {
    %c0_i32 = arith.constant 0 : i32
    return %arg2, %arg0, %arg1 : i32, i32, i32
  }
  func.func @transform_6(%arg0: i32, %arg1: i32, %arg2: i32) -> (i32, i32, i32) {
    %c0_i32 = arith.constant 0 : i32
    return %arg2, %arg0, %arg1 : i32, i32, i32
  }
}

</mosaic_0001>

<llo_original>
// kernel: tpu_custom_call.1
$region0: #{tpu_custom_call.1}
  #allocation0 [shape = 'u32[]', space=smem, size = 0x4, offset = 0x4, fixed_abs, tag = 'smem constant byte address 0x4 - core index']
  #allocation1 [shape = 'u32[72,128]{1,0:T(1,128)}', space=vmem, size = 0x9000, scoped, tag = 'internal scratch']
  #allocation2 [shape = 'f32[2,1024]{1,0:T(2,128)}', space=vmem, size = 0x2000, scoped, tag = 'scratch operand']
  #allocation3 [shape = 'f32[1]{0:T(128)S(6)}', space=smem, size = 0x200, scoped, tag = 'scoped memory for tpu_custom_call.1']
  %s0 = inlined_call_operand.hbm [shape: f32[1,1024], index: 0, kind: input, shape index: {}]
  %s1 = inlined_call_operand.hbm [shape: f32[1,1024], index: 1, kind: input, shape index: {}]
  %s2 = inlined_call_operand.hbm [shape: f32[1,1024], index: 2, kind: input, shape index: {}]
  %s3 = inlined_call_operand.<no memory space> [shape: f32[1], index: 3, kind: input, shape index: {}]
  %s4 = inlined_call_operand.hbm [shape: f32[4,2,1024], index: 4, kind: input, shape index: {}]
  %s5 = inlined_call_operand.hbm [shape: f32[4,2,1024], index: 5, kind: input, shape index: {}]
  %s6 = inlined_call_operand.hbm [shape: bf16[4,2,1024], index: 6, kind: output, shape index: {}]
  %s7 = sld [smem:[#allocation0]]
  $region81: #{tpu_custom_call.1} parent=0
    _
  %s9 = ssub.s32 1, %s7
  %s10 = scalar_select 0, %s9, %s7
  %11 = sst [smem:[#allocation3]] %s3
  $region1: #{tpu_custom_call.1} parent=0
    #allocation4 [shape = 'u8[4096]{0}', space=vmem, size = 0x1000, scoped, tag = 'input window, operand 0, single buffered']
    #allocation5 [shape = 's32[2]{0}', space=sflag, size = 0x8, scoped, tag = 'scoped memory for tpu_custom_call.1']
    #allocation6 [shape = 's32[2]{0}', space=sflag, size = 0x8, scoped, tag = 'scoped memory for tpu_custom_call.1']
    #allocation7 [shape = 'u8[4096]{0}', space=vmem, size = 0x1000, scoped, tag = 'input window, operand 1, single buffered']
    #allocation8 [shape = 's32[1]{0}', space=sflag, size = 0x4, scoped, tag = 'scoped memory for tpu_custom_call.1']
    #allocation9 [shape = 'u8[4096]{0}', space=vmem, size = 0x1000, scoped, tag = 'input window, operand 2, single buffered']
    #allocation10 [shape = 'u8[16384]{0}', space=vmem, size = 0x4000, scoped, tag = 'input window, operand 4']
    #allocation11 [shape = 's32[2]{0}', space=sflag, size = 0x8, scoped, tag = 'scoped memory for tpu_custom_call.1']
    #allocation12 [shape = 'u8[16384]{0}', space=vmem, size = 0x4000, scoped, tag = 'input window, operand 5']
    #allocation13 [shape = 'u8[8192]{0}', space=vmem, size = 0x2000, scoped, tag = 'output window, operand 0']
    %12 = vsyncpa [#allocation5], 0
    %13 = vsyncpa [#allocation8], 0
    %14 = vsyncpa [#allocation11], 0
    %s15 = scalar_lea.sflag [#allocation11], 1
    %16 = vsyncpa %s15, 0
    %17 = vsyncpa [#allocation6], 0
    %s18 = scalar_lea.sflag [#allocation6], 1
    %19 = vsyncpa %s18, 0
    loop: start=0, step=1, limit=6
    $region2: #{tpu_custom_call.1} parent=1 // loop_pre_header
      _
    $region3: #{tpu_custom_call.1} parent=1 // loop_header
      %s21 = sphi 0, %s25
      %p22 = scmp.ge.s32.totalorder %s21, 6
      %s28 = sphi 0, %s47
      %s29 = sphi 0, %s43
      %s30 = sphi 0, %s39
      %s31 = sphi 0, %s28
      %s32 = sphi 0, %s29
      %s33 = sphi 0, %s30
      %s34 = sphi 0, %s31
      %s35 = sphi 0, %s32
      %s36 = sphi 0, %s33
      %s50 = sphi 0, %s52
      %s53 = sphi 0, %s50
      %s54 = sphi 0, %s53
      %s70 = sphi 0, %s54
      %s76 = sphi 0, %s78
      %s79 = sphi 0, %s76
      %s80 = sphi 0, %s79
      %s96 = sphi 0, %s80
      %s102 = sphi 0, %s104
      %s105 = sphi 0, %s102
      %s106 = sphi 0, %s105
      %s122 = sphi 0, %s106
      %s126 = sphi 0, %s126
      %s128 = sphi 0, %s126
      %s129 = sphi 0, %s128
      %s143 = sphi 0, %s129
      %s153 = sphi 0, %s155
      %s156 = sphi 0, %s153
      %s157 = sphi 0, %s156
      %s173 = sphi 0, %s157
      %s183 = sphi 0, %s185
      %s186 = sphi 0, %s183
      %s187 = sphi 0, %s186
      %s203 = sphi 0, %s187
      %s213 = sphi 0, %s215
      %s216 = sphi 0, %s213
      %s217 = sphi 0, %s216
      %s233 = sphi 0, %s217
    $region4: #{tpu_custom_call.1} parent=1 // loop_header_branch
      %24 = sbr.rel (%p22) target = $region8
    $region5: #{tpu_custom_call.1} parent=1 // loop_body
      %s26 = ssub.s32 %s21, 1
      %s27 = ssub.s32 %s21, 2
      %s37 = sadd.s32 1, %s30
      %p38 = scmp.ge.s32.totalorder %s37, 4
      %s39 = scalar_select %p38, 0, %s37
      %s40 = sadd.s32 1, %s29
      %s41 = scalar_select %p38, %s40, %s29
      %p42 = scmp.ge.s32.totalorder %s41, 1
      %s43 = scalar_select %p42, 0, %s41
      %s44 = sadd.s32 1, %s28
      %s45 = scalar_select %p42, %s44, %s28
      %p46 = scmp.ge.s32.totalorder %s45, 1
      %s47 = scalar_select %p46, 0, %s45
      %s48 = ssub.s32 %s29, %s43
      %p49 = scmp.eq.s32.totalorder %s48, 0
      %s51 = sadd.s32 %s50, 1
      %s52 = scalar_select %p49, %s50, %s51
      %p55 = pneg %p49
      %p56 = scmp.eq.s32.totalorder %s21, 3
      %p57 = por %p55, %p56
      %p58 = scmp.ne.s32.totalorder %s50, %s53
      %p59 = scmp.eq.s32.totalorder %s21, 0
      %p60 = por %p58, %p59
      %p61 = scmp.ne.s32.totalorder %s50, %s53
      %p62 = scmp.eq.s32.totalorder %s26, 3
      %p63 = por %p61, %p62
      %p64 = scmp.ne.s32.totalorder %s53, %s54
      %p65 = scmp.eq.s32.totalorder %s26, 0
      %p66 = por %p64, %p65
      %p67 = scmp.ne.s32.totalorder %s53, %s54
      %p68 = scmp.eq.s32.totalorder %s27, 3
      %p69 = por %p67, %p68
      %p71 = scmp.ne.s32.totalorder %s54, %s70
      %p72 = scmp.eq.s32.totalorder %s27, 0
      %p73 = por %p71, %p72
      %s74 = ssub.s32 %s29, %s43
      %p75 = scmp.eq.s32.totalorder %s74, 0
      %s77 = sadd.s32 %s76, 1
      %s78 = scalar_select %p75, %s76, %s77
      %p81 = pneg %p75
      %p82 = scmp.eq.s32.totalorder %s21, 3
      %p83 = por %p81, %p82
      %p84 = scmp.ne.s32.totalorder %s76, %s79
      %p85 = scmp.eq.s32.totalorder %s21, 0
      %p86 = por %p84, %p85
      %p87 = scmp.ne.s32.totalorder %s76, %s79
      %p88 = scmp.eq.s32.totalorder %s26, 3
      %p89 = por %p87, %p88
      %p90 = scmp.ne.s32.totalorder %s79, %s80
      %p91 = scmp.eq.s32.totalorder %s26, 0
      %p92 = por %p90, %p91
      %p93 = scmp.ne.s32.totalorder %s79, %s80
      %p94 = scmp.eq.s32.totalorder %s27, 3
      %p95 = por %p93, %p94
      %p97 = scmp.ne.s32.totalorder %s80, %s96
      %p98 = scmp.eq.s32.totalorder %s27, 0
      %p99 = por %p97, %p98
      %s100 = ssub.s32 %s29, %s43
      %p101 = scmp.eq.s32.totalorder %s100, 0
      %s103 = sadd.s32 %s102, 1
      %s104 = scalar_select %p101, %s102, %s103
      %p107 = pneg %p101
      %p108 = scmp.eq.s32.totalorder %s21, 3
      %p109 = por %p107, %p108
      %p110 = scmp.ne.s32.totalorder %s102, %s105
      %p111 = scmp.eq.s32.totalorder %s21, 0
      %p112 = por %p110, %p111
      %p113 = scmp.ne.s32.totalorder %s102, %s105
      %p114 = scmp.eq.s32.totalorder %s26, 3
      %p115 = por %p113, %p114
      %p116 = scmp.ne.s32.totalorder %s105, %s106
      %p117 = scmp.eq.s32.totalorder %s26, 0
      %p118 = por %p116, %p117
      %p119 = scmp.ne.s32.totalorder %s105, %s106
      %p120 = scmp.eq.s32.totalorder %s27, 3
      %p121 = por %p119, %p120
      %p123 = scmp.ne.s32.totalorder %s106, %s122
      %p124 = scmp.eq.s32.totalorder %s27, 0
      %p125 = por %p123, %p124
      %s127 = sadd.s32 %s126, 1
      %p130 = scmp.eq.s32.totalorder %s21, 3
      %p131 = scmp.ne.s32.totalorder %s126, %s128
      %p132 = scmp.eq.s32.totalorder %s21, 0
      %p133 = por %p131, %p132
      %p134 = scmp.ne.s32.totalorder %s126, %s128
      %p135 = scmp.eq.s32.totalorder %s26, 3
      %p136 = por %p134, %p135
      %p137 = scmp.ne.s32.totalorder %s128, %s129
      %p138 = scmp.eq.s32.totalorder %s26, 0
      %p139 = por %p137, %p138
      %p140 = scmp.ne.s32.totalorder %s128, %s129
      %p141 = scmp.eq.s32.totalorder %s27, 3
      %p142 = por %p140, %p141
      %p144 = scmp.ne.s32.totalorder %s129, %s143
      %p145 = scmp.eq.s32.totalorder %s27, 0
      %p146 = por %p144, %p145
      %s147 = ssub.s32 %s30, %s39
      %s148 = ssub.s32 %s28, %s47
      %s149 = sor.u32 %s147, %s148
      %s150 = ssub.s32 %s29, %s43
      %s151 = sor.u32 %s149, %s150
      %p152 = scmp.eq.s32.totalorder %s151, 0
      %s154 = sadd.s32 %s153, 1
      %s155 = scalar_select %p152, %s153, %s154
      %p158 = pneg %p152
      %p159 = scmp.eq.s32.totalorder %s21, 3
      %p160 = por %p158, %p159
      %p161 = scmp.ne.s32.totalorder %s153, %s156
      %p162 = scmp.eq.s32.totalorder %s21, 0
      %p163 = por %p161, %p162
      %p164 = scmp.ne.s32.totalorder %s153, %s156
      %p165 = scmp.eq.s32.totalorder %s26, 3
      %p166 = por %p164, %p165
      %p167 = scmp.ne.s32.totalorder %s156, %s157
      %p168 = scmp.eq.s32.totalorder %s26, 0
      %p169 = por %p167, %p168
      %p170 = scmp.ne.s32.totalorder %s156, %s157
      %p171 = scmp.eq.s32.totalorder %s27, 3
      %p172 = por %p170, %p171
      %p174 = scmp.ne.s32.totalorder %s157, %s173
      %p175 = scmp.eq.s32.totalorder %s27, 0
      %p176 = por %p174, %p175
      %s177 = ssub.s32 %s30, %s39
      %s178 = ssub.s32 %s28, %s47
      %s179 = sor.u32 %s177, %s178
      %s180 = ssub.s32 %s29, %s43
      %s181 = sor.u32 %s179, %s180
      %p182 = scmp.eq.s32.totalorder %s181, 0
      %s184 = sadd.s32 %s183, 1
      %s185 = scalar_select %p182, %s183, %s184
      %p188 = pneg %p182
      %p189 = scmp.eq.s32.totalorder %s21, 3
      %p190 = por %p188, %p189
      %p191 = scmp.ne.s32.totalorder %s183, %s186
      %p192 = scmp.eq.s32.totalorder %s21, 0
      %p193 = por %p191, %p192
      %p194 = scmp.ne.s32.totalorder %s183, %s186
      %p195 = scmp.eq.s32.totalorder %s26, 3
      %p196 = por %p194, %p195
      %p197 = scmp.ne.s32.totalorder %s186, %s187
      %p198 = scmp.eq.s32.totalorder %s26, 0
      %p199 = por %p197, %p198
      %p200 = scmp.ne.s32.totalorder %s186, %s187
      %p201 = scmp.eq.s32.totalorder %s27, 3
      %p202 = por %p200, %p201
      %p204 = scmp.ne.s32.totalorder %s187, %s203
      %p205 = scmp.eq.s32.totalorder %s27, 0
      %p206 = por %p204, %p205
      %s207 = ssub.s32 %s30, %s39
      %s208 = ssub.s32 %s28, %s47
      %s209 = sor.u32 %s207, %s208
      %s210 = ssub.s32 %s29, %s43
      %s211 = sor.u32 %s209, %s210
      %p212 = scmp.eq.s32.totalorder %s211, 0
      %s214 = sadd.s32 %s213, 1
      %s215 = scalar_select %p212, %s213, %s214
      %p218 = pneg %p212
      %p219 = scmp.eq.s32.totalorder %s21, 3
      %p220 = por %p218, %p219
      %p221 = scmp.ne.s32.totalorder %s213, %s216
      %p222 = scmp.eq.s32.totalorder %s21, 0
      %p223 = por %p221, %p222
      %p224 = scmp.ne.s32.totalorder %s213, %s216
      %p225 = scmp.eq.s32.totalorder %s26, 3
      %p226 = por %p224, %p225
      %p227 = scmp.ne.s32.totalorder %s216, %s217
      %p228 = scmp.eq.s32.totalorder %s26, 0
      %p229 = por %p227, %p228
      %p230 = scmp.ne.s32.totalorder %s216, %s217
      %p231 = scmp.eq.s32.totalorder %s27, 3
      %p232 = por %p230, %p231
      %p234 = scmp.ne.s32.totalorder %s217, %s233
      %p235 = scmp.eq.s32.totalorder %s27, 0
      %p236 = por %p234, %p235
      %p237 = scmp.le.s32.totalorder 1, %s21
      %p238 = scmp.lt.s32.totalorder %s21, 5
      %p239 = pnand %p237, %p238
      %p240 = pneg %p239
      // Predicated region
      $region9: #{tpu_custom_call.1} parent=5 // pred_check
        _
      $region10: #{tpu_custom_call.1} parent=5 // pred_check_branch
        %242 = sbr.rel (%p239) target = $region12
      $region11: #{tpu_custom_call.1} parent=5 // pred_region
        %s243 = ssub.s32 %s21, 1
        // Predicated region
        $region13: #{tpu_custom_call.1} parent=11 // pred_check
          %p244 = pneg %p66
        $region14: #{tpu_custom_call.1} parent=11 // pred_check_branch
          %246 = sbr.rel (%p244) target = $region16
        $region15: #{tpu_custom_call.1} parent=11 // pred_region
          %s247 = smul.u32 8, %s32
          %249 = vsyncadd [#allocation5], 0
          %s250 = scalar_lea.hbm %s0, %s247
          %s252 = sshll.u32 %s250, 4
          %s253 = int_to_ptr.hbm [resolvable:$true] %s252
          %s254 = sshll.u32 [#allocation4], 4
          %s255 = int_to_ptr.vmem [resolvable:$true] %s254
          %257 = dma.hbm_to_vmem [thread:$0]  %s253, 128, %s255, [#allocation5]
        $region16: #{tpu_custom_call.1} parent=11 // pred_fallthru
          _
        // Predicated region
        $region17: #{tpu_custom_call.1} parent=11 // pred_check
          %p258 = pneg %p92
        $region18: #{tpu_custom_call.1} parent=11 // pred_check_branch
          %260 = sbr.rel (%p258) target = $region20
        $region19: #{tpu_custom_call.1} parent=11 // pred_region
          %s261 = smul.u32 8, %s32
          %263 = vsyncadd [#allocation8], 0
          %s264 = scalar_lea.hbm %s1, %s261
          %s266 = sshll.u32 %s264, 4
          %s267 = int_to_ptr.hbm [resolvable:$true] %s266
          %s268 = sshll.u32 [#allocation7], 4
          %s269 = int_to_ptr.vmem [resolvable:$true] %s268
          %271 = dma.hbm_to_vmem [thread:$0]  %s267, 128, %s269, [#allocation8]
        $region20: #{tpu_custom_call.1} parent=11 // pred_fallthru
          _
        // Predicated region
        $region21: #{tpu_custom_call.1} parent=11 // pred_check
          %p272 = pneg %p118
        $region22: #{tpu_custom_call.1} parent=11 // pred_check_branch
          %274 = sbr.rel (%p272) target = $region24
        $region23: #{tpu_custom_call.1} parent=11 // pred_region
          %s275 = smul.u32 8, %s32
          %277 = vsyncadd [#allocation8], 0
          %s278 = scalar_lea.hbm %s2, %s275
          %s280 = sshll.u32 %s278, 4
          %s281 = int_to_ptr.hbm [resolvable:$true] %s280
          %s282 = sshll.u32 [#allocation9], 4
          %s283 = int_to_ptr.vmem [resolvable:$true] %s282
          %285 = dma.hbm_to_vmem [thread:$0]  %s281, 128, %s283, [#allocation8]
        $region24: #{tpu_custom_call.1} parent=11 // pred_fallthru
          _
        // Predicated region
        $region25: #{tpu_custom_call.1} parent=11 // pred_check
          %p286 = pneg %p139
        $region26: #{tpu_custom_call.1} parent=11 // pred_check_branch
          %288 = sbr.rel (%p286) target = $region28
        $region27: #{tpu_custom_call.1} parent=11 // pred_region
          _
        $region28: #{tpu_custom_call.1} parent=11 // pred_fallthru
          _
      $region12: #{tpu_custom_call.1} parent=5 // pred_fallthru
        _
      %p289 = scmp.lt.s32.totalorder %s21, 4
      // Predicated region
      $region29: #{tpu_custom_call.1} parent=5 // pred_check
        %p290 = pneg %p289
      $region30: #{tpu_custom_call.1} parent=5 // pred_check_branch
        %292 = sbr.rel (%p290) target = $region32
      $region31: #{tpu_custom_call.1} parent=5 // pred_region
        // Predicated region
        $region33: #{tpu_custom_call.1} parent=31 // pred_check
          %p293 = pneg %p163
        $region34: #{tpu_custom_call.1} parent=31 // pred_check_branch
          %295 = sbr.rel (%p293) target = $region36
        $region35: #{tpu_custom_call.1} parent=31 // pred_region
          %s296 = sand.u32 %s21, 1
          %s297 = scalar_lea.sflag [#allocation11], %s296
          %s298 = sand.u32 %s153, 1
          %s299 = smul.addr %s298, 16
          %s300 = scalar_lea.vmem [#allocation10], %s299
          %s301 = smul.u32 8, %s29
          %303 = vsyncadd %s297, 0
          %s304 = smul.addr %s28, 8
          %s305 = sadd.s32 %s301, %s304
          %s306 = smul.addr %s30, 8
          %s307 = sadd.s32 %s305, %s306
          %s308 = smul.addr %s307, 2
          %s309 = scalar_lea.hbm %s4, %s308
          %s311 = sshll.u32 %s309, 4
          %s312 = int_to_ptr.hbm [resolvable:$true] %s311
          %s313 = sshll.u32 %s300, 4
          %s314 = int_to_ptr.vmem [resolvable:$true] %s313
          %316 = dma.hbm_to_vmem [thread:$0]  %s312, 256, %s314, %s297
        $region36: #{tpu_custom_call.1} parent=31 // pred_fallthru
          _
        // Predicated region
        $region37: #{tpu_custom_call.1} parent=31 // pred_check
          %p317 = pneg %p193
        $region38: #{tpu_custom_call.1} parent=31 // pred_check_branch
          %319 = sbr.rel (%p317) target = $region40
        $region39: #{tpu_custom_call.1} parent=31 // pred_region
          %s320 = sand.u32 %s21, 1
          %s321 = scalar_lea.sflag [#allocation11], %s320
          %s322 = sand.u32 %s183, 1
          %s323 = smul.addr %s322, 16
          %s324 = scalar_lea.vmem [#allocation12], %s323
          %s325 = smul.u32 8, %s29
          %327 = vsyncadd %s321, 0
          %s328 = smul.addr %s28, 8
          %s329 = sadd.s32 %s325, %s328
          %s330 = smul.addr %s30, 8
          %s331 = sadd.s32 %s329, %s330
          %s332 = smul.addr %s331, 2
          %s333 = scalar_lea.hbm %s5, %s332
          %s335 = sshll.u32 %s333, 4
          %s336 = int_to_ptr.hbm [resolvable:$true] %s335
          %s337 = sshll.u32 %s324, 4
          %s338 = int_to_ptr.vmem [resolvable:$true] %s337
          %340 = dma.hbm_to_vmem [thread:$0]  %s336, 256, %s338, %s321
        $region40: #{tpu_custom_call.1} parent=31 // pred_fallthru
          _
      $region32: #{tpu_custom_call.1} parent=5 // pred_fallthru
        _
      %p341 = scmp.le.s32.totalorder 1, %s21
      %p342 = scmp.lt.s32.totalorder %s21, 5
      %p343 = pnand %p341, %p342
      %p344 = pneg %p343
      // Predicated region
      $region41: #{tpu_custom_call.1} parent=5 // pred_check
        _
      $region42: #{tpu_custom_call.1} parent=5 // pred_check_branch
        %346 = sbr.rel (%p343) target = $region44
      $region43: #{tpu_custom_call.1} parent=5 // pred_region
        %s347 = ssub.s32 %s21, 1
        // Predicated region
        $region45: #{tpu_custom_call.1} parent=43 // pred_check
          %p348 = pneg %p66
        $region46: #{tpu_custom_call.1} parent=43 // pred_check_branch
          %350 = sbr.rel (%p348) target = $region48
        $region47: #{tpu_custom_call.1} parent=43 // pred_region
          %352 = dma.done [#allocation5], 128
        $region48: #{tpu_custom_call.1} parent=43 // pred_fallthru
          _
        // Predicated region
        $region49: #{tpu_custom_call.1} parent=43 // pred_check
          %p353 = pneg %p92
        $region50: #{tpu_custom_call.1} parent=43 // pred_check_branch
          %355 = sbr.rel (%p353) target = $region52
        $region51: #{tpu_custom_call.1} parent=43 // pred_region
          %357 = dma.done [#allocation8], 128
        $region52: #{tpu_custom_call.1} parent=43 // pred_fallthru
          _
        // Predicated region
        $region53: #{tpu_custom_call.1} parent=43 // pred_check
          %p358 = pneg %p118
        $region54: #{tpu_custom_call.1} parent=43 // pred_check_branch
          %360 = sbr.rel (%p358) target = $region56
        $region55: #{tpu_custom_call.1} parent=43 // pred_region
          %362 = dma.done [#allocation8], 128
        $region56: #{tpu_custom_call.1} parent=43 // pred_fallthru
          _
        %s363 = sand.u32 %s26, 1
        %s364 = scalar_lea.sflag [#allocation11], %s363
        %s365 = sand.u32 %s156, 1
        %s366 = smul.addr %s365, 16
        %s367 = scalar_lea.vmem [#allocation10], %s366
        // Predicated region
        $region57: #{tpu_custom_call.1} parent=43 // pred_check
          %p368 = pneg %p169
        $region58: #{tpu_custom_call.1} parent=43 // pred_check_branch
          %370 = sbr.rel (%p368) target = $region60
        $region59: #{tpu_custom_call.1} parent=43 // pred_region
          %372 = dma.done %s364, 256
        $region60: #{tpu_custom_call.1} parent=43 // pred_fallthru
          _
        %s373 = sand.u32 %s26, 1
        %s374 = scalar_lea.sflag [#allocation11], %s373
        %s375 = sand.u32 %s186, 1
        %s376 = smul.addr %s375, 16
        %s377 = scalar_lea.vmem [#allocation12], %s376
        // Predicated region
        $region61: #{tpu_custom_call.1} parent=43 // pred_check
          %p378 = pneg %p199
        $region62: #{tpu_custom_call.1} parent=43 // pred_check_branch
          %380 = sbr.rel (%p378) target = $region64
        $region63: #{tpu_custom_call.1} parent=43 // pred_region
          %382 = dma.done %s374, 256
        $region64: #{tpu_custom_call.1} parent=43 // pred_fallthru
          _
        %p383 = pneg %p66
        %p384 = pneg %p63
        %p385 = pneg %p92
        %p386 = pneg %p89
        %p387 = pneg %p118
        %p388 = pneg %p115
        %p389 = pneg %p139
        %p390 = pneg %p136
        %s391 = sand.u32 %s26, 1
        %s392 = scalar_lea.sflag [#allocation11], %s391
        %s393 = sand.u32 %s156, 1
        %s394 = smul.addr %s393, 16
        %s395 = scalar_lea.vmem [#allocation10], %s394
        %p396 = pneg %p169
        %p397 = pneg %p166
        %s398 = sand.u32 %s26, 1
        %s399 = scalar_lea.sflag [#allocation11], %s398
        %s400 = sand.u32 %s186, 1
        %s401 = smul.addr %s400, 16
        %s402 = scalar_lea.vmem [#allocation12], %s401
        %p403 = pneg %p199
        %p404 = pneg %p196
        %p405 = pneg %p229
        %p406 = pneg %p226
        %s407 = sand.u32 %s216, 1
        %s408 = scalar_lea.sflag [#allocation6], %s407
        %s409 = sand.u32 %s216, 1
        %s410 = smul.addr %s409, 8
        %s411 = scalar_lea.vmem [#allocation13], %s410
        %s412 = smul.u32 8, %s32
        %s413 = smul.u32 8, %s32
        %s414 = smul.u32 8, %s32
        %s415 = smul.u32 8, %s32
        %s416 = smul.u32 8, %s32
        %s417 = smul.u32 8, %s32
        %p418 = scmp.eq.s32.totalorder %s33, 0
        // Predicated region
        $region65: #{tpu_custom_call.1} parent=43 // pred_check
          %p419 = pneg %p418
        $region66: #{tpu_custom_call.1} parent=43 // pred_check_branch
          %421 = sbr.rel (%p419) target = $region68
        $region67: #{tpu_custom_call.1} parent=43 // pred_region
          %422 = vst [vmem:[#allocation2] sm:$0xff] 0.0
          %423 = vst [vmem:[#allocation2 + $0x8] sm:$0xff] 0.0
        $region68: #{tpu_custom_call.1} parent=43 // pred_fallthru
          _
        %s424 = sld [smem:[#allocation3]]
        %v425 = vld [vmem:[%s367] sm:$0xff]
        %v426 = vld [vmem:[%s367 + $0x8] sm:$0xff]
        %v427 = vld [vmem:[#allocation4] sm:$0xff]
        %v429 = vperm.slane %v427, 0
        %v430 = vperm.slane %v427, 1
        %v431 = vperm.slane %v427, 2
        %v432 = vperm.slane %v427, 3
        %v433 = vperm.slane %v427, 4
        %v434 = vperm.slane %v427, 5
        %v435 = vperm.slane %v427, 6
        %v436 = vperm.slane %v427, 7
        %v437 = vrot.slane %v430, 6
        %v438 = vrot.slane %v431, 4
        %v439 = vrot.slane %v432, 2
        %v440 = vrot.slane %v434, 6
        %v441 = vrot.slane %v435, 4
        %v442 = vrot.slane %v436, 2
        %vm443 = vcmask 1041408
        %v444 = vsel %vm443, %v429, %v437
        %vm445 = vcmask 1045508
        %v446 = vsel %vm445, %v438, %v439
        %vm447 = vcmask 1043456
        %v448 = vsel %vm447, %v444, %v446
        %v449 = vsel %vm443, %v433, %v440
        %v450 = vsel %vm445, %v441, %v442
        %v451 = vsel %vm447, %v449, %v450
        %v454 = vmul.f32 %v425, %v448
        %v455 = vmul.f32 %v426, %v451
        %v456 = vld [vmem:[%s377] sm:$0xff]
        %v457 = vld [vmem:[%s377 + $0x8] sm:$0xff]
        %v458 = vld [vmem:[#allocation7] sm:$0xff]
        %v460 = vperm.slane %v458, 0
        %v461 = vperm.slane %v458, 1
        %v462 = vperm.slane %v458, 2
        %v463 = vperm.slane %v458, 3
        %v464 = vperm.slane %v458, 4
        %v465 = vperm.slane %v458, 5
        %v466 = vperm.slane %v458, 6
        %v467 = vperm.slane %v458, 7
        %v468 = vrot.slane %v461, 6
        %v469 = vrot.slane %v462, 4
        %v470 = vrot.slane %v463, 2
        %v471 = vrot.slane %v465, 6
        %v472 = vrot.slane %v466, 4
        %v473 = vrot.slane %v467, 2
        %v474 = vsel %vm443, %v460, %v468
        %v475 = vsel %vm445, %v469, %v470
        %v476 = vsel %vm447, %v474, %v475
        %v477 = vsel %vm443, %v464, %v471
        %v478 = vsel %vm445, %v472, %v473
        %v479 = vsel %vm447, %v477, %v478
        %v482 = vmul.f32 %v456, %v476
        %v483 = vmul.f32 %v457, %v479
        %v484 = vadd.f32 %v454, %v482
        %v485 = vadd.f32 %v455, %v483
        %v486 = vld [vmem:[#allocation9] sm:$0xff]
        %v488 = vperm.slane %v486, 0
        %v489 = vperm.slane %v486, 1
        %v490 = vperm.slane %v486, 2
        %v491 = vperm.slane %v486, 3
        %v492 = vperm.slane %v486, 4
        %v493 = vperm.slane %v486, 5
        %v494 = vperm.slane %v486, 6
        %v495 = vperm.slane %v486, 7
        %v496 = vrot.slane %v489, 6
        %v497 = vrot.slane %v490, 4
        %v498 = vrot.slane %v491, 2
        %v499 = vrot.slane %v493, 6
        %v500 = vrot.slane %v494, 4
        %v501 = vrot.slane %v495, 2
        %v502 = vsel %vm443, %v488, %v496
        %v503 = vsel %vm445, %v497, %v498
        %v504 = vsel %vm447, %v502, %v503
        %v505 = vsel %vm443, %v492, %v499
        %v506 = vsel %vm445, %v500, %v501
        %v507 = vsel %vm447, %v505, %v506
        %v510 = vadd.f32 %v484, %v504
        %v511 = vadd.f32 %v485, %v507
        %v512 = vld [vmem:[#allocation2] sm:$0xff]
        %v513 = vld [vmem:[#allocation2 + $0x8] sm:$0xff]
        %v514 = vadd.f32 %v512, %v510
        %v515 = vadd.f32 %v513, %v511
        %v516 = vstv %s424
        %vm517 = vcmp.ge.f32.partialorder %v514, %v516
        %vm518 = vcmp.ge.f32.partialorder %v515, %v516
        %v519 = vsel %vm517, 1, 0
        %v520 = vsel %vm518, 1, 0
        %v521 = vcvt.s32.f32 %v519
        %v522 = vcvt.s32.f32 %v520
        %525 = vst [vmem:[#allocation1] ss:$4 sm:$0xff] %v521
        %s526 = scalar_lea.vmem [#allocation1], 32
        %527 = vst [vmem:[%s526] ss:$4 sm:$0xff] %v522
        %v528 = vld.sshfl [vmem:[#allocation1] sm:$0xff pattern:$0x73625140]
        %v529 = vld.sshfl [vmem:[#allocation1 + $0x8] sm:$0xff pattern:$0x73625140]
        %v530 = vld.sshfl [vmem:[#allocation1 + $0x10] sm:$0xff pattern:$0x73625140]
        %v531 = vld.sshfl [vmem:[#allocation1 + $0x18] sm:$0xff pattern:$0x73625140]
        %v532 = vld.sshfl [vmem:[#allocation1 + $0x20] sm:$0xff pattern:$0x73625140]
        %v533 = vld.sshfl [vmem:[#allocation1 + $0x28] sm:$0xff pattern:$0x73625140]
        %v534 = vld.sshfl [vmem:[#allocation1 + $0x30] sm:$0xff pattern:$0x73625140]
        %v535 = vld.sshfl [vmem:[#allocation1 + $0x38] sm:$0xff pattern:$0x73625140]
        %v544 = vpack.c.bf16 %v529, %v528
        %v545 = vpack.c.bf16 %v531, %v530
        %v546 = vpack.c.bf16 %v533, %v532
        %v547 = vpack.c.bf16 %v535, %v534
        %v552 = vrot.slane %v544, 3
        %v553 = vrot.slane %v545, 6
        %v554 = vrot.slane %v545, 1
        %v555 = vrot.slane %v546, 4
        %v556 = vrot.slane %v546, 7
        %v557 = vrot.slane %v547, 2
        %v558 = vrot.slane %v547, 5
        %vm559 = vcmask 1040384
        %v562 = vsel %vm559, %v544, %v552
        %vm563 = vcmask 1042434
        %v566 = vsel %vm563, %v553, %v554
        %v567 = vsel %vm443, %v562, %v566
        %vm568 = vcmask 1044484
        %v571 = vsel %vm568, %v555, %v556
        %vm572 = vcmask 1046534
        %v575 = vsel %vm572, %v557, %v558
        %v576 = vsel %vm445, %v571, %v575
        %v577 = vsel %vm447, %v567, %v576
        %579 = vst [vmem:[%s411] sm:$0xff] %v577
        %v580 = vsub.f32 %v514, %v516
        %v581 = vsub.f32 %v515, %v516
        %v582 = vsel %vm517, %v580, %v514
        %v583 = vsel %vm518, %v581, %v515
        %584 = vst [vmem:[#allocation2] sm:$0xff] %v582
        %585 = vst [vmem:[#allocation2 + $0x8] sm:$0xff] %v583
        %s586 = sand.u32 %s216, 1
        %s587 = scalar_lea.sflag [#allocation6], %s586
        %s588 = sand.u32 %s216, 1
        %s589 = smul.addr %s588, 8
        %s590 = scalar_lea.vmem [#allocation13], %s589
        // Predicated region
        $region69: #{tpu_custom_call.1} parent=43 // pred_check
          %p591 = pneg %p226
        $region70: #{tpu_custom_call.1} parent=43 // pred_check_branch
          %593 = sbr.rel (%p591) target = $region72
        $region71: #{tpu_custom_call.1} parent=43 // pred_region
          %s594 = smul.u32 8, %s32
          %596 = vsyncadd %s587, 0
          %s597 = smul.addr %s31, 8
          %s598 = sadd.s32 %s594, %s597
          %s599 = smul.addr %s33, 8
          %s600 = sadd.s32 %s598, %s599
          %s601 = scalar_lea.hbm %s6, %s600
          %s603 = sshll.u32 %s590, 4
          %s604 = int_to_ptr.vmem [resolvable:$true] %s603
          %s605 = sshll.u32 %s601, 4
          %s606 = int_to_ptr.hbm [resolvable:$true] %s605
          %608 = dma.vmem_to_hbm [thread:$0]  %s604, 128, %s606, %s587
        $region72: #{tpu_custom_call.1} parent=43 // pred_fallthru
          _
      $region44: #{tpu_custom_call.1} parent=5 // pred_fallthru
        _
      %p609 = scmp.le.s32.totalorder 2, %s21
      // Predicated region
      $region73: #{tpu_custom_call.1} parent=5 // pred_check
        %p610 = pneg %p609
      $region74: #{tpu_custom_call.1} parent=5 // pred_check_branch
        %612 = sbr.rel (%p610) target = $region76
      $region75: #{tpu_custom_call.1} parent=5 // pred_region
        %s613 = ssub.s32 %s21, 2
        // Predicated region
        $region77: #{tpu_custom_call.1} parent=75 // pred_check
          %p614 = pneg %p232
        $region78: #{tpu_custom_call.1} parent=75 // pred_check_branch
          %616 = sbr.rel (%p614) target = $region80
        $region79: #{tpu_custom_call.1} parent=75 // pred_region
          %s617 = sand.u32 %s217, 1
          %s618 = scalar_lea.sflag [#allocation6], %s617
          %s619 = sand.u32 %s217, 1
          %s620 = smul.addr %s619, 8
          %s621 = scalar_lea.vmem [#allocation13], %s620
          %623 = dma.done %s618, 128
        $region80: #{tpu_custom_call.1} parent=75 // pred_fallthru
          _
      $region76: #{tpu_custom_call.1} parent=5 // pred_fallthru
        _
    $region6: #{tpu_custom_call.1} parent=1 // loop_footer
      %s25 = sadd.s32 1, %s21
    $region7: #{tpu_custom_call.1} parent=1 // loop_footer_branch
      %20 = sbr.rel target = $region3
    $region8: #{tpu_custom_call.1} parent=1 // loop_exit
      _
    %624 = vsyncpa [#allocation5], 1
    %s625 = scalar_lea.sflag [#allocation5], 1
    %626 = vsyncpa %s625, 1
    %627 = vsyncpa [#allocation8], 1
    %628 = vsyncpa [#allocation11], 1
    %s629 = scalar_lea.sflag [#allocation11], 1
    %630 = vsyncpa %s629, 1
    %631 = vsyncpa [#allocation6], 1
    %s632 = scalar_lea.sflag [#allocation6], 1
    %633 = vsyncpa %s632, 1

</llo_original>
